<compile_context>
chip_gen: v7x
topology: tpu7x:2x2x1
jax: 0.10.0
libtpu: 0.0.40
codegen_flags: <defaults>
</compile_context>

<pallas_src>
import functools

import jax
import jax.numpy as jnp
from jax.experimental import pallas as pl
from jax.experimental.pallas import tpu as pltpu


def _round_up(x, m):
    return (x + m - 1) // m * m


# ---------------------------------------------------------------------------
# Pass 1: sequential RNN recurrence, U timesteps unrolled per grid iteration.
# ---------------------------------------------------------------------------
def rnn_recurrence_kernel(tok_ref,        # (U, B_pad, 1)     int32   per-step block
                          w_embih_ref,    # (V_pad, H_pad)    f32     resident (= table @ W_ih)
                          whh_ref,        # (H_pad, H_pad)    f32     resident
                          brnn_ref,       # (1, H_pad)        f32     resident (b_ih + b_hh)
                          h0_ref,         # (B_pad, H_pad)    f32     resident
                          hseq_ref,       # (U, B_pad, H_pad) f32     per-step block
                          hfin_ref,       # (B_pad, H_pad)    f32     resident carry
                          *, n_unroll, seq_len, guard_tail):
    i = pl.program_id(0)

    # Initialize the VMEM-resident hidden-state carry on the first grid step.
    @pl.when(i == 0)
    def _():
        hfin_ref[...] = h0_ref[...]

    h = hfin_ref[...]                                     # (B_pad, H_pad)
    b_pad = h.shape[0]
    v_pad = w_embih_ref.shape[0]

    # Loop invariants hoisted (JAX does not CSE broadcast_in_dim).
    col_ids = jax.lax.broadcasted_iota(jnp.int32, (b_pad, v_pad), 1)
    w_embih = w_embih_ref[...]
    w_hh = whh_ref[...]
    b_rnn = brnn_ref[...]

    for u in range(n_unroll):                             # static unroll
        # One-hot "gather" on the MXU: onehot @ (table @ W_ih) == emb @ W_ih.
        onehot = (tok_ref[u] == col_ids).astype(jnp.float32)    # (B_pad, V_pad)
        pre = (jnp.dot(onehot, w_embih, preferred_element_type=jnp.float32)
               + jnp.dot(h, w_hh, preferred_element_type=jnp.float32)
               + b_rnn)                                    # (B_pad, H_pad)
        h_new = jnp.tanh(pre)
        hseq_ref[u] = h_new                                # per-step hidden slab
        if guard_tail:
            # Steps past seq_len (tail padding) must not advance the carry.
            h = jnp.where(i * n_unroll + u < seq_len, h_new, h)
        else:
            h = h_new

    hfin_ref[...] = h                                      # carry for next grid step


# ---------------------------------------------------------------------------
# Pass 2: batched output projection + log-softmax over all (T*B) rows.
# ---------------------------------------------------------------------------
def projection_logsoftmax_kernel(h_ref,      # (tm, H_pad)
                                 wlin_ref,   # (H_pad, V_pad)   resident
                                 blin_ref,   # (1, V_pad)       resident (-1e30 on pad cols)
                                 logp_ref):  # (tm, V_pad)
    logits = (jnp.dot(h_ref[...], wlin_ref[...], preferred_element_type=jnp.float32)
              + blin_ref[...])
    m = jnp.max(logits, axis=-1, keepdims=True)
    lse = jnp.log(jnp.sum(jnp.exp(logits - m), axis=-1, keepdims=True)) + m
    logp_ref[...] = logits - lse


# ---------------------------------------------------------------------------
# Wrapper: multi-step fused decode.
# ---------------------------------------------------------------------------
def decoder_decode(params, token_seq, hidden, *, unroll=8, row_tile=128):
    """token_seq: (B, T) int32; hidden: (1, B, H) f32.
    Returns (logp (T, B, V) f32, hidden (1, B, H) f32)."""
    emb_table, w_ih, w_hh, b_rnn, w_lin, b_lin = params
    B, T = token_seq.shape
    V, _E = emb_table.shape
    H = w_hh.shape[0]

    B_pad = _round_up(B, 8)
    H_pad = _round_up(H, 128)
    V_pad = _round_up(V, 128)

    U = max(1, min(unroll, T))          # unrolled steps per grid iteration
    n_grid = -(-T // U)
    T_pad = n_grid * U

    f32 = jnp.float32
    # Fold the embedding table into the input projection (valid at eval:
    # dropout is identity), then zero-pad everything to (8,128) tiles.
    w_embih = emb_table @ w_ih                                    # (V, H)
    w_embih_p = jnp.zeros((V_pad, H_pad), f32).at[:V, :H].set(w_embih)
    w_hh_p = jnp.zeros((H_pad, H_pad), f32).at[:H, :H].set(w_hh)
    b_rnn_p = jnp.zeros((1, H_pad), f32).at[:, :H].set(b_rnn)
    h0_p = jnp.zeros((B_pad, H_pad), f32).at[:B, :H].set(hidden[0])
    tok_p = jnp.zeros((T_pad, B_pad, 1), jnp.int32).at[:T, :B, 0].set(
        token_seq.T.astype(jnp.int32))

    const2 = lambda i: (0, 0)
    step3 = lambda i: (i, 0, 0)

    rnn_kernel = functools.partial(
        rnn_recurrence_kernel, n_unroll=U, seq_len=T, guard_tail=(T_pad != T))

    # ---- Pass 1: sequential recurrence -> per-step hidden slab + final h ----
    h_seq, h_fin = pl.pallas_call(
        rnn_kernel,
        out_shape=(jax.ShapeDtypeStruct((T_pad, B_pad, H_pad), f32),
                   jax.ShapeDtypeStruct((B_pad, H_pad), f32)),
        grid=(n_grid,),
        in_specs=[
            pl.BlockSpec((U, B_pad, 1), step3),        # token ids (per grid step)
            pl.BlockSpec((V_pad, H_pad), const2),      # folded table @ W_ih (resident)
            pl.BlockSpec((H_pad, H_pad), const2),      # W_hh (resident)
            pl.BlockSpec((1, H_pad), const2),          # b_ih + b_hh (resident)
            pl.BlockSpec((B_pad, H_pad), const2),      # initial hidden (resident)
        ],
        out_specs=(
            pl.BlockSpec((U, B_pad, H_pad), step3),    # hidden states per step
            pl.BlockSpec((B_pad, H_pad), const2),      # final hidden (resident carry)
        ),
        compiler_params=pltpu.CompilerParams(
            dimension_semantics=("arbitrary",)),       # time axis is sequential
    )(tok_p, w_embih_p, w_hh_p, b_rnn_p, h0_p)

    # ---- Pass 2: batched projection + log-softmax (parallel grid) ----
    w_lin_p = jnp.zeros((H_pad, V_pad), f32).at[:H, :V].set(w_lin)
    # Padded vocab columns get -1e30 so exp underflows to 0 in the LSE.
    b_lin_p = jnp.full((1, V_pad), -1e30, f32).at[:, :V].set(b_lin)

    M_total = T_pad * B_pad                           # multiple of 8
    tm = min(M_total, row_tile)                       # row tile (multiple of 8)
    M_pad = _round_up(M_total, tm)
    h_rows = h_seq.reshape(M_total, H_pad)
    if M_pad != M_total:
        h_rows = jnp.zeros((M_pad, H_pad), f32).at[:M_total].set(h_rows)

    logp_rows = pl.pallas_call(
        projection_logsoftmax_kernel,
        out_shape=jax.ShapeDtypeStruct((M_pad, V_pad), f32),
        grid=(M_pad // tm,),
        in_specs=[
            pl.BlockSpec((tm, H_pad), lambda i: (i, 0)),
            pl.BlockSpec((H_pad, V_pad), const2),      # W_lin (resident)
            pl.BlockSpec((1, V_pad), const2),          # b_lin (resident)
        ],
        out_specs=pl.BlockSpec((tm, V_pad), lambda i: (i, 0)),
        compiler_params=pltpu.CompilerParams(
            dimension_semantics=("parallel",)),
    )(h_rows, w_lin_p, b_lin_p)

    logp = logp_rows[:M_total].reshape(T_pad, B_pad, V_pad)[:T, :B, :V]
    return logp, h_fin[None, :B, :H]


def decoder_forward(params, token_ids, hidden):
    """Exact module semantics: token_ids (B, 1) -> (logp (B, V), hidden (1, B, H))."""
    logp, h_new = decoder_decode(params, token_ids, hidden)   # (B, 1) == (B, T=1)
    return logp[0], h_new


# ---------------------------------------------------------------------------
# Params + pure-JAX references.
# ---------------------------------------------------------------------------
def init_params(key, emb_size, decoder_hidden_size, output_size):
    ks = jax.random.split(key, 7)
    scale = 0.1
    emb_table = scale * jax.random.normal(ks[0], (output_size, emb_size), jnp.float32)
    # Stored as (in_features, out_features) so the kernel computes x @ W.
    w_ih = scale * jax.random.normal(ks[1], (emb_size, decoder_hidden_size), jnp.float32)
    w_hh = scale * jax.random.normal(ks[2], (decoder_hidden_size, decoder_hidden_size), jnp.float32)
    b_ih = scale * jax.random.normal(ks[3], (decoder_hidden_size,), jnp.float32)
    b_hh = scale * jax.random.normal(ks[4], (decoder_hidden_size,), jnp.float32)
    b_rnn = (b_ih + b_hh)[None, :]                       # (1, H)
    w_lin = scale * jax.random.normal(ks[5], (decoder_hidden_size, output_size), jnp.float32)
    b_lin = (scale * jax.random.normal(ks[6], (output_size,), jnp.float32))[None, :]  # (1, V)
    return (emb_table, w_ih, w_hh, b_rnn, w_lin, b_lin)


def reference_forward(params, token_ids, hidden):
    emb_table, w_ih, w_hh, b_rnn, w_lin, b_lin = params
    emb = jnp.take(emb_table, token_ids[:, 0], axis=0)
    h_new = jnp.tanh(emb @ w_ih + hidden[0] @ w_hh + b_rnn)
    logits = h_new @ w_lin + b_lin
    return jax.nn.log_softmax(logits, axis=-1), h_new[None]


def reference_decode(params, token_seq, hidden):
    emb_table, w_ih, w_hh, b_rnn, w_lin, b_lin = params
    h = hidden[0]
    outs = []
    for t in range(token_seq.shape[1]):
        emb = jnp.take(emb_table, token_seq[:, t], axis=0)
        h = jnp.tanh(emb @ w_ih + h @ w_hh + b_rnn)
        logits = h @ w_lin + b_lin
        outs.append(jax.nn.log_softmax(logits, axis=-1))
    return jnp.stack(outs, axis=0), h[None]


if __name__ == "__main__":
    # Small shapes consistent with the module (exercises batch / hidden /
    # vocab padding, step unrolling with a tail, and multi-tile pass 2).
    B, E, H, V = 2, 32, 32, 100    # batch, emb_size, decoder_hidden_size, output_size
    T = 20                         # decode steps (U=8 -> 3 grid steps, tail of 4)

    key = jax.random.PRNGKey(0)
    kp, ki, kh, ks = jax.random.split(key, 4)
    params = init_params(kp, E, H, V)

    token_ids = jax.random.randint(ki, (B, 1), 0, V, dtype=jnp.int32)   # module input (B, 1)
    hidden0 = jax.random.normal(kh, (1, B, H), jnp.float32)             # (1, B, H)
    token_seq = jax.random.randint(ks, (B, T), 0, V, dtype=jnp.int32)   # fused decode tokens

    # Single-step forward (exact module semantics).
    logp, hidden1 = decoder_forward(params, token_ids, hidden0)
    # Fused multi-step decode (weights VMEM-resident across all T steps).
    logp_seq, hidden_T = decoder_decode(params, token_seq, hidden0)
    jax.block_until_ready((logp, hidden1, logp_seq, hidden_T))

    # Sanity checks against pure-JAX references.
    ref_logp, ref_hidden1 = reference_forward(params, token_ids, hidden0)
    assert logp.shape == (B, V) and hidden1.shape == (1, B, H)
    assert jnp.allclose(logp, ref_logp, atol=1e-5, rtol=1e-5)
    assert jnp.allclose(hidden1, ref_hidden1, atol=1e-5, rtol=1e-5)

    ref_logp_seq, ref_hidden_T = reference_decode(params, token_seq, hidden0)
    assert logp_seq.shape == (T, B, V) and hidden_T.shape == (1, B, H)
    assert jnp.allclose(logp_seq, ref_logp_seq, atol=1e-4, rtol=1e-4)
    assert jnp.allclose(hidden_T, ref_hidden_T, atol=1e-4, rtol=1e-4)

    print("KERNEL_OK")
</pallas_src>

<mosaic_0001>
module attributes {stable_mosaic.version = 11 : i64} {
  func.func @rnn_recurrence_kernel(%arg0: i32, %arg1: memref<1x8x1xi32, #tpu.memory_space<vmem>>, %arg2: memref<128x128xf32, #tpu.memory_space<vmem>>, %arg3: memref<128x128xf32, #tpu.memory_space<vmem>>, %arg4: memref<1x128xf32, #tpu.memory_space<vmem>>, %arg5: memref<8x128xf32, #tpu.memory_space<vmem>>, %arg6: memref<1x8x128xf32, #tpu.memory_space<vmem>>, %arg7: memref<8x128xf32, #tpu.memory_space<vmem>>) attributes {dimension_semantics = [#tpu.dimension_semantics<arbitrary>], iteration_bounds = array<i64: 1>, scalar_prefetch = 0 : i64, scratch_operands = 0 : i64, tpu.core_type = #tpu.core_type<tc>, window_params = [{transform_indices = @transform_0, window_bounds = array<i64: 1, 8, 1>}, {pipeline_mode = #tpu.pipeline_mode<synchronous>, transform_indices = @transform_1, window_bounds = array<i64: 128, 128>}, {pipeline_mode = #tpu.pipeline_mode<synchronous>, transform_indices = @transform_2, window_bounds = array<i64: 128, 128>}, {pipeline_mode = #tpu.pipeline_mode<synchronous>, transform_indices = @transform_3, window_bounds = array<i64: 1, 128>}, {pipeline_mode = #tpu.pipeline_mode<synchronous>, transform_indices = @transform_4, window_bounds = array<i64: 8, 128>}, {transform_indices = @transform_5, window_bounds = array<i64: 1, 8, 128>}, {pipeline_mode = #tpu.pipeline_mode<synchronous>, transform_indices = @transform_6, window_bounds = array<i64: 8, 128>}]} {
    %c0_i32 = arith.constant 0 : i32
    %0 = arith.cmpi eq, %arg0, %c0_i32 : i32
    %1 = arith.extui %0 : i1 to i32
    %c0_i32_0 = arith.constant 0 : i32
    %2 = arith.cmpi ne, %1, %c0_i32_0 : i32
    scf.if %2 {
      %c0_17 = arith.constant 0 : index
      %c0_18 = arith.constant 0 : index
      %24 = vector.load %arg5[%c0_17, %c0_18] : memref<8x128xf32, #tpu.memory_space<vmem>>, vector<8x128xf32>
      %c0_19 = arith.constant 0 : index
      %c0_20 = arith.constant 0 : index
      %25 = vector.load %arg7[%c0_19, %c0_20] : memref<8x128xf32, #tpu.memory_space<vmem>>, vector<8x128xf32>
      tpu.vector_store %arg7[%c0_19, %c0_20], %24 {strides = array<i32>} : memref<8x128xf32, #tpu.memory_space<vmem>>, vector<8x128xf32>,
    } else {
    }
    %c0 = arith.constant 0 : index
    %c0_1 = arith.constant 0 : index
    %3 = vector.load %arg7[%c0, %c0_1] : memref<8x128xf32, #tpu.memory_space<vmem>>, vector<8x128xf32>
    %4 = tpu.iota {dimensions = array<i32: 1>} : vector<8x128xi32>
    %c0_2 = arith.constant 0 : index
    %c0_3 = arith.constant 0 : index
    %5 = vector.load %arg2[%c0_2, %c0_3] : memref<128x128xf32, #tpu.memory_space<vmem>>, vector<128x128xf32>
    %c0_4 = arith.constant 0 : index
    %c0_5 = arith.constant 0 : index
    %6 = vector.load %arg3[%c0_4, %c0_5] : memref<128x128xf32, #tpu.memory_space<vmem>>, vector<128x128xf32>
    %c0_6 = arith.constant 0 : index
    %c0_7 = arith.constant 0 : index
    %7 = vector.load %arg4[%c0_6, %c0_7] : memref<1x128xf32, #tpu.memory_space<vmem>>, vector<1x128xf32>
    %c0_8 = arith.constant 0 : index
    %c0_9 = arith.constant 0 : index
    %c0_10 = arith.constant 0 : index
    %8 = vector.load %arg1[%c0_8, %c0_9, %c0_10] : memref<1x8x1xi32, #tpu.memory_space<vmem>>, vector<1x8x1xi32>
    %9 = vector.shape_cast %8 : vector<1x8x1xi32> to vector<8x1xi32>
    %10 = vector.broadcast %9 : vector<8x1xi32> to vector<8x128xi32>
    %11 = arith.cmpi eq, %10, %4 : vector<8x128xi32>
    %12 = arith.extui %11 : vector<8x128xi1> to vector<8x128xi32>
    %13 = arith.sitofp %12 : vector<8x128xi32> to vector<8x128xf32>
    %cst = arith.constant dense<0.000000e+00> : vector<8x128xf32>
    %14 = tpu.matmul %13, %5, %cst {dimension_numbers = #tpu.dot_dimension_numbers<[1], [0], [0], [1], [0, 0, 1, 1], [], []>} : vector<8x128xf32>, vector<128x128xf32>, vector<8x128xf32> -> vector<8x128xf32>
    %cst_11 = arith.constant dense<0.000000e+00> : vector<8x128xf32>
    %15 = tpu.matmul %3, %6, %cst_11 {dimension_numbers = #tpu.dot_dimension_numbers<[1], [0], [0], [1], [0, 0, 1, 1], [], []>} : vector<8x128xf32>, vector<128x128xf32>, vector<8x128xf32> -> vector<8x128xf32>
    %16 = arith.addf %14, %15 : vector<8x128xf32>
    %17 = vector.broadcast %7 : vector<1x128xf32> to vector<8x128xf32>
    %18 = arith.addf %16, %17 : vector<8x128xf32>
    %19 = math.tanh %18 : vector<8x128xf32>
    %c0_12 = arith.constant 0 : index
    %c0_13 = arith.constant 0 : index
    %c0_14 = arith.constant 0 : index
    %20 = vector.load %arg6[%c0_12, %c0_13, %c0_14] : memref<1x8x128xf32, #tpu.memory_space<vmem>>, vector<1x8x128xf32>
    %21 = vector.shape_cast %20 : vector<1x8x128xf32> to vector<8x128xf32>
    %22 = vector.shape_cast %19 : vector<8x128xf32> to vector<1x8x128xf32>
    tpu.vector_store %arg6[%c0_12, %c0_13, %c0_14], %22 {strides = array<i32>} : memref<1x8x128xf32, #tpu.memory_space<vmem>>, vector<1x8x128xf32>,
    %c0_15 = arith.constant 0 : index
    %c0_16 = arith.constant 0 : index
    %23 = vector.load %arg7[%c0_15, %c0_16] : memref<8x128xf32, #tpu.memory_space<vmem>>, vector<8x128xf32>
    tpu.vector_store %arg7[%c0_15, %c0_16], %19 {strides = array<i32>} : memref<8x128xf32, #tpu.memory_space<vmem>>, vector<8x128xf32>,
    return
  }
  func.func @transform_0(%arg0: i32) -> (i32, i32, i32) {
    %c0_i32 = arith.constant 0 : i32
    %c0_i32_0 = arith.constant 0 : i32
    %c0_i32_1 = arith.constant 0 : i32
    return %arg0, %c0_i32, %c0_i32_0 : i32, i32, i32
  }
  func.func @transform_1(%arg0: i32) -> (i32, i32) {
    %c0_i32 = arith.constant 0 : i32
    %c0_i32_0 = arith.constant 0 : i32
    %c0_i32_1 = arith.constant 0 : i32
    return %c0_i32, %c0_i32_0 : i32, i32
  }
  func.func @transform_2(%arg0: i32) -> (i32, i32) {
    %c0_i32 = arith.constant 0 : i32
    %c0_i32_0 = arith.constant 0 : i32
    %c0_i32_1 = arith.constant 0 : i32
    return %c0_i32, %c0_i32_0 : i32, i32
  }
  func.func @transform_3(%arg0: i32) -> (i32, i32) {
    %c0_i32 = arith.constant 0 : i32
    %c0_i32_0 = arith.constant 0 : i32
    %c0_i32_1 = arith.constant 0 : i32
    return %c0_i32, %c0_i32_0 : i32, i32
  }
  func.func @transform_4(%arg0: i32) -> (i32, i32) {
    %c0_i32 = arith.constant 0 : i32
    %c0_i32_0 = arith.constant 0 : i32
    %c0_i32_1 = arith.constant 0 : i32
    return %c0_i32, %c0_i32_0 : i32, i32
  }
  func.func @transform_5(%arg0: i32) -> (i32, i32, i32) {
    %c0_i32 = arith.constant 0 : i32
    %c0_i32_0 = arith.constant 0 : i32
    %c0_i32_1 = arith.constant 0 : i32
    return %arg0, %c0_i32, %c0_i32_0 : i32, i32, i32
  }
  func.func @transform_6(%arg0: i32) -> (i32, i32) {
    %c0_i32 = arith.constant 0 : i32
    %c0_i32_0 = arith.constant 0 : i32
    %c0_i32_1 = arith.constant 0 : i32
    return %c0_i32, %c0_i32_0 : i32, i32
  }
}

</mosaic_0001>

<llo_original>
// kernel: tpu_custom_call.1
$region0: #{tpu_custom_call.1}
  #allocation0 [shape = 'u32[]', space=smem, size = 0x4, offset = 0x4, fixed_abs, tag = 'smem constant byte address 0x4 - core index']
  #allocation1 [shape = 'u32[144,128]{1,0:T(1,128)}', space=vmem, size = 0x12000, scoped, tag = 'internal scratch']
  %s0 = inlined_call_operand.vmem [shape: s32[1,8,1], index: 0, kind: input, shape index: {}]
  %s1 = inlined_call_operand.hbm [shape: f32[128,128], index: 1, kind: input, shape index: {}]
  %s2 = inlined_call_operand.hbm [shape: f32[128,128], index: 2, kind: input, shape index: {}]
  %s3 = inlined_call_operand.vmem [shape: f32[1,128], index: 3, kind: input, shape index: {}]
  %s4 = inlined_call_operand.vmem [shape: f32[8,128], index: 4, kind: input, shape index: {}]
  %s5 = inlined_call_operand.hbm [shape: f32[1,8,128], index: 5, kind: output, shape index: {0}]
  %s6 = inlined_call_operand.hbm [shape: f32[8,128], index: 6, kind: output, shape index: {1}]
  %7 = xla_tuple %s5, %s6
  %s8 = sld [smem:[#allocation0]]
  $region50: #{tpu_custom_call.1} parent=0
    _
  %s10 = ssub.s32 1, %s8
  %s11 = scalar_select 0, %s10, %s8
  $region1: #{tpu_custom_call.1} parent=0
    #allocation2 [shape = 'u8[65536]{0}', space=vmem, size = 0x10000, scoped, tag = 'input window, operand 1, single buffered']
    #allocation3 [shape = 's32[1]{0}', space=sflag, size = 0x4, scoped, tag = 'scoped memory for tpu_custom_call.1']
    #allocation4 [shape = 's32[1]{0}', space=sflag, size = 0x4, scoped, tag = 'scoped memory for tpu_custom_call.1']
    #allocation5 [shape = 'u8[65536]{0}', space=vmem, size = 0x10000, scoped, tag = 'input window, operand 2, single buffered']
    #allocation6 [shape = 's32[1]{0}', space=sflag, size = 0x4, scoped, tag = 'scoped memory for tpu_custom_call.1']
    #allocation7 [shape = 'u8[4096]{0}', space=vmem, size = 0x1000, scoped, tag = 'output window, operand 0, single buffered']
    #allocation8 [shape = 'u8[4096]{0}', space=vmem, size = 0x1000, scoped, tag = 'output window, operand 1, single buffered']
    #allocation9 [shape = 's32[1]{0}', space=sflag, size = 0x4, scoped, tag = 'scoped memory for tpu_custom_call.1']
    %12 = vsyncpa [#allocation3], 0
    %13 = vsyncpa [#allocation6], 0
    %14 = vsyncpa [#allocation4], 0
    %15 = vsyncpa [#allocation9], 0
    // Predicated region
    $region2: #{tpu_custom_call.1} parent=1 // pred_check
      _
    $region3: #{tpu_custom_call.1} parent=1 // pred_check_branch
      %17 = sbr.rel (0) target = $region5
    $region4: #{tpu_custom_call.1} parent=1 // pred_region
      _
    $region5: #{tpu_custom_call.1} parent=1 // pred_fallthru
      _
    // Predicated region
    $region6: #{tpu_custom_call.1} parent=1 // pred_check
      _
    $region7: #{tpu_custom_call.1} parent=1 // pred_check_branch
      %19 = sbr.rel (0) target = $region9
    $region8: #{tpu_custom_call.1} parent=1 // pred_region
      %s21 = ssub.s32 2048, 2048
      %22 = vsyncadd [#allocation3], %s21
      %s23 = sshll.u32 [#allocation2], 4
      %s24 = int_to_ptr.vmem [resolvable:$true] %s23
      %29 = dma.hbm_to_vmem [thread:$0]  %s1, 2048, %s24, [#allocation3], 128, 128, 8
    $region9: #{tpu_custom_call.1} parent=1 // pred_fallthru
      _
    // Predicated region
    $region10: #{tpu_custom_call.1} parent=1 // pred_check
      _
    $region11: #{tpu_custom_call.1} parent=1 // pred_check_branch
      %31 = sbr.rel (0) target = $region13
    $region12: #{tpu_custom_call.1} parent=1 // pred_region
      %s33 = ssub.s32 2048, 2048
      %34 = vsyncadd [#allocation6], %s33
      %s35 = sshll.u32 [#allocation5], 4
      %s36 = int_to_ptr.vmem [resolvable:$true] %s35
      %41 = dma.hbm_to_vmem [thread:$0]  %s2, 2048, %s36, [#allocation6], 128, 128, 8
    $region13: #{tpu_custom_call.1} parent=1 // pred_fallthru
      _
    // Predicated region
    $region14: #{tpu_custom_call.1} parent=1 // pred_check
      _
    $region15: #{tpu_custom_call.1} parent=1 // pred_check_branch
      %43 = sbr.rel (0) target = $region17
    $region16: #{tpu_custom_call.1} parent=1 // pred_region
      _
    $region17: #{tpu_custom_call.1} parent=1 // pred_fallthru
      _
    // Predicated region
    $region18: #{tpu_custom_call.1} parent=1 // pred_check
      _
    $region19: #{tpu_custom_call.1} parent=1 // pred_check_branch
      %45 = sbr.rel (0) target = $region21
    $region20: #{tpu_custom_call.1} parent=1 // pred_region
      _
    $region21: #{tpu_custom_call.1} parent=1 // pred_fallthru
      _
    // Predicated region
    $region22: #{tpu_custom_call.1} parent=1 // pred_check
      _
    $region23: #{tpu_custom_call.1} parent=1 // pred_check_branch
      %47 = sbr.rel (0) target = $region25
    $region24: #{tpu_custom_call.1} parent=1 // pred_region
      %48 = dma.done [#allocation3], 2048
    $region25: #{tpu_custom_call.1} parent=1 // pred_fallthru
      _
    // Predicated region
    $region26: #{tpu_custom_call.1} parent=1 // pred_check
      _
    $region27: #{tpu_custom_call.1} parent=1 // pred_check_branch
      %50 = sbr.rel (0) target = $region29
    $region28: #{tpu_custom_call.1} parent=1 // pred_region
      %51 = dma.done [#allocation6], 2048
    $region29: #{tpu_custom_call.1} parent=1 // pred_fallthru
      _
    %p52 = scmp.eq.s32.totalorder 0, 0
    // Predicated region
    $region30: #{tpu_custom_call.1} parent=1 // pred_check
      %p53 = pneg %p52
    $region31: #{tpu_custom_call.1} parent=1 // pred_check_branch
      %55 = sbr.rel (%p53) target = $region33
    $region32: #{tpu_custom_call.1} parent=1 // pred_region
      %v56 = vld [vmem:[%s4] sm:$0xff]
      %57 = vst [vmem:[#allocation8] sm:$0xff] %v56
    $region33: #{tpu_custom_call.1} parent=1 // pred_fallthru
      _
    %v58 = vld [vmem:[#allocation8] sm:$0xff]
    %v59 = vlaneseq
    %v60 = vand.u32 %v59, 127
    %v61 = vld [vmem:[#allocation2] sm:$0xff]
    %v62 = vld [vmem:[#allocation2 + $0x8] sm:$0xff]
    %v63 = vld [vmem:[#allocation2 + $0x10] sm:$0xff]
    %v64 = vld [vmem:[#allocation2 + $0x18] sm:$0xff]
    %v65 = vld [vmem:[#allocation2 + $0x20] sm:$0xff]
    %v66 = vld [vmem:[#allocation2 + $0x28] sm:$0xff]
    %v67 = vld [vmem:[#allocation2 + $0x30] sm:$0xff]
    %v68 = vld [vmem:[#allocation2 + $0x38] sm:$0xff]
    %v69 = vld [vmem:[#allocation2 + $0x40] sm:$0xff]
    %v70 = vld [vmem:[#allocation2 + $0x48] sm:$0xff]
    %v71 = vld [vmem:[#allocation2 + $0x50] sm:$0xff]
    %v72 = vld [vmem:[#allocation2 + $0x58] sm:$0xff]
    %v73 = vld [vmem:[#allocation2 + $0x60] sm:$0xff]
    %v74 = vld [vmem:[#allocation2 + $0x68] sm:$0xff]
    %v75 = vld [vmem:[#allocation2 + $0x70] sm:$0xff]
    %v76 = vld [vmem:[#allocation2 + $0x78] sm:$0xff]
    %v77 = vld [vmem:[#allocation5] sm:$0xff]
    %v78 = vld [vmem:[#allocation5 + $0x8] sm:$0xff]
    %v79 = vld [vmem:[#allocation5 + $0x10] sm:$0xff]
    %v80 = vld [vmem:[#allocation5 + $0x18] sm:$0xff]
    %v81 = vld [vmem:[#allocation5 + $0x20] sm:$0xff]
    %v82 = vld [vmem:[#allocation5 + $0x28] sm:$0xff]
    %v83 = vld [vmem:[#allocation5 + $0x30] sm:$0xff]
    %v84 = vld [vmem:[#allocation5 + $0x38] sm:$0xff]
    %v85 = vld [vmem:[#allocation5 + $0x40] sm:$0xff]
    %v86 = vld [vmem:[#allocation5 + $0x48] sm:$0xff]
    %v87 = vld [vmem:[#allocation5 + $0x50] sm:$0xff]
    %v88 = vld [vmem:[#allocation5 + $0x58] sm:$0xff]
    %v89 = vld [vmem:[#allocation5 + $0x60] sm:$0xff]
    %v90 = vld [vmem:[#allocation5 + $0x68] sm:$0xff]
    %v91 = vld [vmem:[#allocation5 + $0x70] sm:$0xff]
    %v92 = vld [vmem:[#allocation5 + $0x78] sm:$0xff]
    %v93 = vld [vmem:[%s3] sm:$0x1]
    %v94 = vld [vmem:[%s0] sm:$0xff]
    %95 = vset.pattern.permute.xlu0 0
    %96 = vperm.xlu0 %95, %v94
    %v97 = vpop.permute.xlu0 %96
    %vm98 = vcmp.eq.s32.totalorder %v97, %v60
    %v99 = vsel %vm98, 1, 0
    %v100 = vcvt.s32.f32 %v99
    %101 = vmatprep.subr.mxu0 0.0
    %102 = vmatpush1.msra.mxu0 %v77
    %103 = vmatprep.subr.mxu0 0.0
    %104 = vmatpush1.msra.mxu0 %v78
    %105 = vmatprep.subr.mxu0 0.0
    %106 = vmatpush1.msra.mxu0 %v79
    %107 = vmatprep.subr.mxu0 0.0
    %108 = vmatpush1.msra.mxu0 %v80
    %109 = vmatprep.subr.mxu0 0.0
    %110 = vmatpush1.msra.mxu0 %v81
    %111 = vmatprep.subr.mxu0 0.0
    %112 = vmatpush1.msra.mxu0 %v82
    %113 = vmatprep.subr.mxu0 0.0
    %114 = vmatpush1.msra.mxu0 %v83
    %115 = vmatprep.subr.mxu0 0.0
    %116 = vmatpush1.msra.mxu0 %v84
    %117 = vmatprep.subr.mxu0 0.0
    %118 = vmatpush1.msra.mxu0 %v85
    %119 = vmatprep.subr.mxu0 0.0
    %120 = vmatpush1.msra.mxu0 %v86
    %121 = vmatprep.subr.mxu0 0.0
    %122 = vmatpush1.msra.mxu0 %v87
    %123 = vmatprep.subr.mxu0 0.0
    %124 = vmatpush1.msra.mxu0 %v88
    %125 = vmatprep.subr.mxu0 0.0
    %126 = vmatpush1.msra.mxu0 %v89
    %127 = vmatprep.subr.mxu0 0.0
    %128 = vmatpush1.msra.mxu0 %v90
    %129 = vmatprep.subr.mxu0 0.0
    %130 = vmatpush1.msra.mxu0 %v91
    %131 = vmatprep.subr.mxu0 0.0
    %132 = vmatpush1.msra.mxu0 %v92
    %133 = vmatprep.subr.mxu0 0.0
    %134 = vmatpush1.msra.mxu0 0.0
    %135 = vmatprep.subr.mxu0 0.0
    %136 = vmatpush1.msra.mxu0 0.0
    %137 = vmatprep.subr.mxu0 0.0
    %138 = vmatpush1.msra.mxu0 0.0
    %139 = vmatprep.subr.mxu0 0.0
    %140 = vmatpush1.msra.mxu0 0.0
    %141 = vmatprep.subr.mxu0 0.0
    %142 = vmatpush1.msra.mxu0 0.0
    %143 = vmatprep.subr.mxu0 0.0
    %144 = vmatpush1.msra.mxu0 0.0
    %145 = vmatprep.subr.mxu0 0.0
    %146 = vmatpush1.msra.mxu0 0.0
    %147 = vmatprep.subr.mxu0 0.0
    %148 = vmatpush1.msra.mxu0 0.0
    %149 = vmatprep.subr.mxu0 0.0
    %150 = vmatpush1.msra.mxu0 0.0
    %151 = vmatprep.subr.mxu0 0.0
    %152 = vmatpush1.msra.mxu0 0.0
    %153 = vmatprep.subr.mxu0 0.0
    %154 = vmatpush1.msra.mxu0 0.0
    %155 = vmatprep.subr.mxu0 0.0
    %156 = vmatpush1.msra.mxu0 0.0
    %157 = vmatprep.subr.mxu0 0.0
    %158 = vmatpush1.msra.mxu0 0.0
    %159 = vmatprep.subr.mxu0 0.0
    %160 = vmatpush1.msra.mxu0 0.0
    %161 = vmatprep.subr.mxu0 0.0
    %162 = vmatpush1.msra.mxu0 0.0
    %163 = vmatprep.subr.mxu0 0.0
    %164 = vmatpush1.msra.mxu0 0.0
    %165 = vmatprep.mubr.f32.mxu0 0.0
    %166 = vmatmul.mubr.f32.gmra.mrb[0].mxu0 %v58
    %v167 = vpop.f32.mrb[0].mxu0
    %v168 = vadd.f32 0.0, %v167
    %v169 = vpop.f32.mrb[0].mxu0
    %170 = vdwg.mxu0
    %171 = vmatprep.subr.mxu0 0.0
    %172 = vmatpush1.msra.mxu0 %v61
    %173 = vmatprep.subr.mxu0 0.0
    %174 = vmatpush1.msra.mxu0 %v62
    %175 = vmatprep.subr.mxu0 0.0
    %176 = vmatpush1.msra.mxu0 %v63
    %177 = vmatprep.subr.mxu0 0.0
    %178 = vmatpush1.msra.mxu0 %v64
    %179 = vmatprep.subr.mxu0 0.0
    %180 = vmatpush1.msra.mxu0 %v65
    %181 = vmatprep.subr.mxu0 0.0
    %182 = vmatpush1.msra.mxu0 %v66
    %183 = vmatprep.subr.mxu0 0.0
    %184 = vmatpush1.msra.mxu0 %v67
    %185 = vmatprep.subr.mxu0 0.0
    %186 = vmatpush1.msra.mxu0 %v68
    %187 = vmatprep.subr.mxu0 0.0
    %188 = vmatpush1.msra.mxu0 %v69
    %189 = vmatprep.subr.mxu0 0.0
    %190 = vmatpush1.msra.mxu0 %v70
    %191 = vmatprep.subr.mxu0 0.0
    %192 = vmatpush1.msra.mxu0 %v71
    %193 = vmatprep.subr.mxu0 0.0
    %194 = vmatpush1.msra.mxu0 %v72
    %195 = vmatprep.subr.mxu0 0.0
    %196 = vmatpush1.msra.mxu0 %v73
    %197 = vmatprep.subr.mxu0 0.0
    %198 = vmatpush1.msra.mxu0 %v74
    %199 = vmatprep.subr.mxu0 0.0
    %200 = vmatpush1.msra.mxu0 %v75
    %201 = vmatprep.subr.mxu0 0.0
    %202 = vmatpush1.msra.mxu0 %v76
    %203 = vmatprep.subr.mxu0 0.0
    %204 = vmatpush1.msra.mxu0 0.0
    %205 = vmatprep.subr.mxu0 0.0
    %206 = vmatpush1.msra.mxu0 0.0
    %207 = vmatprep.subr.mxu0 0.0
    %208 = vmatpush1.msra.mxu0 0.0
    %209 = vmatprep.subr.mxu0 0.0
    %210 = vmatpush1.msra.mxu0 0.0
    %211 = vmatprep.subr.mxu0 0.0
    %212 = vmatpush1.msra.mxu0 0.0
    %213 = vmatprep.subr.mxu0 0.0
    %214 = vmatpush1.msra.mxu0 0.0
    %215 = vmatprep.subr.mxu0 0.0
    %216 = vmatpush1.msra.mxu0 0.0
    %217 = vmatprep.subr.mxu0 0.0
    %218 = vmatpush1.msra.mxu0 0.0
    %219 = vmatprep.subr.mxu0 0.0
    %220 = vmatpush1.msra.mxu0 0.0
    %221 = vmatprep.subr.mxu0 0.0
    %222 = vmatpush1.msra.mxu0 0.0
    %223 = vmatprep.subr.mxu0 0.0
    %224 = vmatpush1.msra.mxu0 0.0
    %225 = vmatprep.subr.mxu0 0.0
    %226 = vmatpush1.msra.mxu0 0.0
    %227 = vmatprep.subr.mxu0 0.0
    %228 = vmatpush1.msra.mxu0 0.0
    %229 = vmatprep.subr.mxu0 0.0
    %230 = vmatpush1.msra.mxu0 0.0
    %231 = vmatprep.subr.mxu0 0.0
    %232 = vmatpush1.msra.mxu0 0.0
    %233 = vmatprep.subr.mxu0 0.0
    %234 = vmatpush1.msra.mxu0 0.0
    %235 = vmatprep.mubr.f32.mxu0 0.0
    %236 = vmatmul.mubr.f32.gmra.mrb[0].mxu0 %v100
    %v237 = vpop.f32.mrb[0].mxu0
    %v238 = vadd.f32 %v168, %v237
    %v239 = vpop.f32.mrb[0].mxu0
    %240 = vdwg.mxu0
    %v242 = vlaneseq
    %v243 = vshrl.u32 %v242, 7
    %v244 = vsub.s32 0, %v243
    %v245 = vrot.slane %v93, %v244
    %v247 = vadd.f32 %v238, %v245
    %v248 = vtanh.pop %v247
    %249 = vst [vmem:[#allocation7] sm:$0xff] %v248
    %250 = vst [vmem:[#allocation8] sm:$0xff] %v248
    // Predicated region
    $region34: #{tpu_custom_call.1} parent=1 // pred_check
      _
    $region35: #{tpu_custom_call.1} parent=1 // pred_check_branch
      %252 = sbr.rel (0) target = $region37
    $region36: #{tpu_custom_call.1} parent=1 // pred_region
      %s254 = ssub.s32 128, 128
      %255 = vsyncadd [#allocation4], %s254
      %s257 = sshll.u32 [#allocation7], 4
      %s258 = int_to_ptr.vmem [resolvable:$true] %s257
      %260 = dma.vmem_to_hbm [thread:$0]  %s258, 128, %s5, [#allocation4]
    $region37: #{tpu_custom_call.1} parent=1 // pred_fallthru
      _
    // Predicated region
    $region38: #{tpu_custom_call.1} parent=1 // pred_check
      _
    $region39: #{tpu_custom_call.1} parent=1 // pred_check_branch
      %262 = sbr.rel (0) target = $region41
    $region40: #{tpu_custom_call.1} parent=1 // pred_region
      %s264 = ssub.s32 128, 128
      %265 = vsyncadd [#allocation9], %s264
      %s267 = sshll.u32 [#allocation8], 4
      %s268 = int_to_ptr.vmem [resolvable:$true] %s267
      %270 = dma.vmem_to_hbm [thread:$0]  %s268, 128, %s6, [#allocation9]
    $region41: #{tpu_custom_call.1} parent=1 // pred_fallthru
      _
    // Predicated region
    $region42: #{tpu_custom_call.1} parent=1 // pred_check
      _
    $region43: #{tpu_custom_call.1} parent=1 // pred_check_branch
      %272 = sbr.rel (0) target = $region45
    $region44: #{tpu_custom_call.1} parent=1 // pred_region
      %273 = dma.done [#allocation4], 128
    $region45: #{tpu_custom_call.1} parent=1 // pred_fallthru
      _
    // Predicated region
    $region46: #{tpu_custom_call.1} parent=1 // pred_check
      _
    $region47: #{tpu_custom_call.1} parent=1 // pred_check_branch
      %275 = sbr.rel (0) target = $region49
    $region48: #{tpu_custom_call.1} parent=1 // pred_region
      %276 = dma.done [#allocation9], 128
    $region49: #{tpu_custom_call.1} parent=1 // pred_fallthru
      _
    %277 = vsyncpa [#allocation3], 1
    %278 = vsyncpa [#allocation6], 1
    %279 = vsyncpa [#allocation4], 1
    %280 = vsyncpa [#allocation9], 1

</llo_original>
